<compile_context>
chip_gen: v5e
topology: v5e:2x2
jax: 0.10.0
libtpu: 0.0.40
codegen_flags: <defaults>
</compile_context>

<pallas_src>
import functools
import math
import warnings

import jax
import jax.numpy as jnp
from jax.experimental import pallas as pl
from jax.experimental.pallas import tpu as pltpu


def _semseg_kernel(x_ref, wfc_ref, bfc_ref, wcls_ref, bcls_ref, out_ref, *, n_layers, fold):
    # x_ref: (tile_rows, Cp) packed points (source dtype); weights are small resident blocks.
    tile_rows = x_ref.shape[0]
    w_fc = wfc_ref[...]                      # (Cp, Cp) bf16 block-diagonal
    b_fc = bfc_ref[...]                      # (1, Cp) f32 -- broadcast row, NOT a full tile

    h = x_ref[...].astype(jnp.bfloat16)      # cast to bf16 in-kernel (MXU feed)
    for _ in range(n_layers):                # shared weights (mirrors the PyTorch module)
        a = jnp.dot(h, w_fc, preferred_element_type=jnp.float32) + b_fc
        h = jnp.maximum(a, 0.0).astype(jnp.bfloat16)   # bias/ReLU in f32 (v5e-friendly)

    logits = jnp.dot(h, wcls_ref[...], preferred_element_type=jnp.float32) + bcls_ref[...]
    if fold > 1:
        # Lane-dense store: fold `fold` packed rows (sublanes) into one wide lane row.
        # Row-major flat order is identical, so the wrapper's unpack reshape is unchanged.
        logits = logits.reshape(tile_rows // fold, fold * logits.shape[-1])
    out_ref[...] = logits.astype(out_ref.dtype)


def semseg_forward(x, w_fc, b_fc, w_cls, b_cls, *, n_layers, tile_points=8192):
    """x: (N, C) float point features (already concatenated across samples).

    Returns (point_cls_logits (1, N, num_cls) float32, kpts_preds (N,) int32).
    """
    N, C = x.shape
    num_cls = w_cls.shape[0]

    # ---- pack P points per 128-lane row via block-diagonal weights -------------------
    if 0 < C < 128 and 128 % C == 0:
        P = 128 // C
    else:
        P = 1
        warnings.warn(
            f"SemSeg Pallas kernel: C={C} does not pack evenly into 128 lanes; "
            "falling back to P=1 (lane utilization and store density drop).")
    Cp = C * P
    ncp = num_cls * P

    # Fold `fold` packed rows of logits into one lane-dense output row.
    fold = min(8, 128 // ncp) if (ncp <= 128 and 128 % ncp == 0) else 1

    # Tile alignment: bf16 sublane packing (16) and out-block second-minor (8 * fold).
    TA = math.lcm(16, 8 * fold)
    rows = -(-N // P)                                        # packed rows needed (ceil)

    # Target ~tile_points points per tile; cap so the grid keeps >= ~8 pipelined steps
    # when there is enough work (>= 4 per TensorCore on v7x's 2-core parallel sharding).
    target_rows = max(TA, (max(tile_points // P, TA) // TA) * TA)
    cap = max(TA, (rows // 8) // TA * TA)
    tile_rows = min(target_rows, cap)

    grid_n = -(-rows // tile_rows)
    if grid_n > 1 and grid_n % 2:            # keep an even step count for v7x megacore
        grid_n += 1
    rows_pad = grid_n * tile_rows
    n_pad = rows_pad * P

    # Stream x at its incoming dtype (no separate wrapper-side f32->bf16 pass);
    # pad only when the grid actually requires it.
    x_in = jnp.asarray(x)
    if n_pad != N:
        x_in = jnp.pad(x_in, ((0, n_pad - N), (0, 0)))
    x_packed = x_in.reshape(rows_pad, Cp)

    eye = jnp.eye(P, dtype=jnp.float32)
    w_fc_bd = jnp.kron(eye, jnp.asarray(w_fc, jnp.float32).T).astype(jnp.bfloat16)    # (Cp, Cp)
    w_cls_bd = jnp.kron(eye, jnp.asarray(w_cls, jnp.float32).T).astype(jnp.bfloat16)  # (Cp, ncp)
    b_fc_t = jnp.tile(jnp.asarray(b_fc, jnp.float32), P).reshape(1, Cp)
    b_cls_t = jnp.tile(jnp.asarray(b_cls, jnp.float32), P).reshape(1, ncp)

    def _run(fold_):
        out_cols = fold_ * ncp
        kernel = functools.partial(_semseg_kernel, n_layers=n_layers, fold=fold_)
        return pl.pallas_call(
            kernel,
            out_shape=jax.ShapeDtypeStruct((rows_pad // fold_, out_cols), jnp.float32),
            grid_spec=pltpu.PrefetchScalarGridSpec(
                num_scalar_prefetch=0,
                grid=(grid_n,),
                in_specs=[
                    pl.BlockSpec((tile_rows, Cp), lambda i: (i, 0)),   # packed x tile
                    pl.BlockSpec((Cp, Cp), lambda i: (0, 0)),          # block-diag fc weight
                    pl.BlockSpec((1, Cp), lambda i: (0, 0)),           # fc bias row (f32)
                    pl.BlockSpec((Cp, ncp), lambda i: (0, 0)),         # block-diag cls weight
                    pl.BlockSpec((1, ncp), lambda i: (0, 0)),          # cls bias row (f32)
                ],
                out_specs=pl.BlockSpec((tile_rows // fold_, out_cols), lambda i: (i, 0)),
            ),
            compiler_params=pltpu.CompilerParams(
                dimension_semantics=("parallel",)),
        )(x_packed, w_fc_bd, b_fc_t, w_cls_bd, b_cls_t)

    try:
        logits_packed = _run(fold)
    except Exception:
        if fold == 1:
            raise
        # Insurance: if this Mosaic build rejects the in-kernel narrow-minor reshape,
        # fall back to the (correct but narrower-store) un-folded output.
        logits_packed = _run(1)

    # Un-pack: folded/unfolded slabs have identical row-major flat order.
    logits = logits_packed.reshape(rows_pad * P, num_cls)[:N]
    point_cls_logits = logits.reshape(1, N, num_cls)        # torch layout (1, N, num_cls)
    # argmax(softmax(x)) == argmax(x); tiny argmax stays in XLA so the kernel's store
    # stream remains a single dense f32 slab (first-occurrence semantics match torch).
    kpts_preds = jnp.argmax(logits, axis=-1).astype(jnp.int32)
    return point_cls_logits, kpts_preds

    # TODO(synk): optional follow-ups per review -- bf16 logits writeback and fp8 (e4m3)
    # x / weight streaming on v7x only, both gated on argmax-parity validation.


def xavier_uniform(key, shape):
    fan_out, fan_in = shape[0], shape[1]
    a = (6.0 / (fan_in + fan_out)) ** 0.5
    return jax.random.uniform(key, shape, jnp.float32, minval=-a, maxval=a)


def reference_forward(x, w_fc, b_fc, w_cls, b_cls, n_layers):
    # Pure-JAX reference emulating the kernel's mixed precision:
    # bf16 matmul operands, f32 accumulation, f32 bias-add / ReLU.
    h = jnp.asarray(x, jnp.float32).astype(jnp.bfloat16)
    wf = jnp.asarray(w_fc, jnp.float32).astype(jnp.bfloat16)
    wc = jnp.asarray(w_cls, jnp.float32).astype(jnp.bfloat16)
    for _ in range(n_layers):
        a = jnp.dot(h, wf.T, preferred_element_type=jnp.float32) + b_fc[None, :]
        h = jnp.maximum(a, 0.0).astype(jnp.bfloat16)
    logits = jnp.dot(h, wc.T, preferred_element_type=jnp.float32) + b_cls[None, :]
    return logits.reshape(1, *logits.shape), jnp.argmax(logits, axis=-1).astype(jnp.int32)


if __name__ == "__main__":
    # Small shapes consistent with the module: in_channels=32, num_cls=4, n_layers=2,
    # two point clouds of 128 points each -> N = 256 total points.
    in_channels = 32
    num_cls = 4
    n_layers = 2
    pts_per_sample = 128
    num_samples = 2
    N = pts_per_sample * num_samples

    key = jax.random.PRNGKey(0)
    k_feat, k_wfc, k_wcls = jax.random.split(key, 3)

    # point_features: list of (pts, C) tensors -> concatenated along points.
    point_features = [
        jax.random.normal(jax.random.fold_in(k_feat, i),
                          (pts_per_sample, in_channels), jnp.float32)
        for i in range(num_samples)
    ]
    x = jnp.concatenate(point_features, axis=0)          # (N, C)

    # Deterministic Xavier-uniform init (biases zero), Conv1d weight (out, in, 1) -> (out, in).
    w_fc = xavier_uniform(k_wfc, (in_channels, in_channels))
    b_fc = jnp.zeros((in_channels,), jnp.float32)
    w_cls = xavier_uniform(k_wcls, (num_cls, in_channels))
    b_cls = jnp.zeros((num_cls,), jnp.float32)

    logits, preds = semseg_forward(x, w_fc, b_fc, w_cls, b_cls, n_layers=n_layers)
    jax.block_until_ready((logits, preds))

    # Sanity check against a pure-JAX reference (same bf16/f32 mixed precision).
    ref_logits, ref_preds = reference_forward(x, w_fc, b_fc, w_cls, b_cls, n_layers)
    assert logits.shape == (1, N, num_cls) and preds.shape == (N,)
    assert jnp.allclose(logits, ref_logits, atol=2e-3, rtol=2e-3)
    assert jnp.array_equal(preds, ref_preds)

    # TODO(synk): per-sample mask selection + furthest_point_sample CPM downsampling
    # (and loss/target building) is dynamic-shape, data-dependent control flow with no
    # clean Pallas equivalent; it stays host/XLA-side.

    print("KERNEL_OK")
</pallas_src>

<mosaic_0001>
module attributes {stable_mosaic.version = 11 : i64} {
  func.func @_semseg_kernel(%arg0: i32, %arg1: memref<64x128xf32, #tpu.memory_space<vmem>>, %arg2: memref<128x128xbf16, #tpu.memory_space<vmem>>, %arg3: memref<1x128xf32, #tpu.memory_space<vmem>>, %arg4: memref<128x16xbf16, #tpu.memory_space<vmem>>, %arg5: memref<1x16xf32, #tpu.memory_space<vmem>>, %arg6: memref<8x128xf32, #tpu.memory_space<vmem>>) attributes {dimension_semantics = [#tpu.dimension_semantics<parallel>], iteration_bounds = array<i64: 1>, scalar_prefetch = 0 : i64, scratch_operands = 0 : i64, tpu.core_type = #tpu.core_type<tc>, window_params = [{transform_indices = @transform_0, window_bounds = array<i64: 64, 128>}, {pipeline_mode = #tpu.pipeline_mode<synchronous>, transform_indices = @transform_1, window_bounds = array<i64: 128, 128>}, {pipeline_mode = #tpu.pipeline_mode<synchronous>, transform_indices = @transform_2, window_bounds = array<i64: 1, 128>}, {pipeline_mode = #tpu.pipeline_mode<synchronous>, transform_indices = @transform_3, window_bounds = array<i64: 128, 16>}, {pipeline_mode = #tpu.pipeline_mode<synchronous>, transform_indices = @transform_4, window_bounds = array<i64: 1, 16>}, {transform_indices = @transform_5, window_bounds = array<i64: 8, 128>}]} {
    %c0 = arith.constant 0 : index
    %c0_0 = arith.constant 0 : index
    %0 = vector.load %arg2[%c0, %c0_0] : memref<128x128xbf16, #tpu.memory_space<vmem>>, vector<128x128xbf16>
    %c0_1 = arith.constant 0 : index
    %c0_2 = arith.constant 0 : index
    %1 = vector.load %arg3[%c0_1, %c0_2] : memref<1x128xf32, #tpu.memory_space<vmem>>, vector<1x128xf32>
    %c0_3 = arith.constant 0 : index
    %c0_4 = arith.constant 0 : index
    %2 = vector.load %arg1[%c0_3, %c0_4] : memref<64x128xf32, #tpu.memory_space<vmem>>, vector<64x128xf32>
    %3 = arith.truncf %2 : vector<64x128xf32> to vector<64x128xbf16>
    %cst = arith.constant dense<0.000000e+00> : vector<64x128xf32>
    %4 = tpu.matmul %3, %0, %cst {dimension_numbers = #tpu.dot_dimension_numbers<[1], [0], [0], [1], [0, 0, 1, 1], [], []>} : vector<64x128xbf16>, vector<128x128xbf16>, vector<64x128xf32> -> vector<64x128xf32>
    %5 = vector.broadcast %1 : vector<1x128xf32> to vector<64x128xf32>
    %6 = arith.addf %4, %5 : vector<64x128xf32>
    %cst_5 = arith.constant 0.000000e+00 : f32
    %7 = vector.broadcast %cst_5 : f32 to vector<64x128xf32>
    %8 = arith.maximumf %6, %7 : vector<64x128xf32>
    %9 = arith.truncf %8 : vector<64x128xf32> to vector<64x128xbf16>
    %cst_6 = arith.constant dense<0.000000e+00> : vector<64x128xf32>
    %10 = tpu.matmul %9, %0, %cst_6 {dimension_numbers = #tpu.dot_dimension_numbers<[1], [0], [0], [1], [0, 0, 1, 1], [], []>} : vector<64x128xbf16>, vector<128x128xbf16>, vector<64x128xf32> -> vector<64x128xf32>
    %11 = vector.broadcast %1 : vector<1x128xf32> to vector<64x128xf32>
    %12 = arith.addf %10, %11 : vector<64x128xf32>
    %cst_7 = arith.constant 0.000000e+00 : f32
    %13 = vector.broadcast %cst_7 : f32 to vector<64x128xf32>
    %14 = arith.maximumf %12, %13 : vector<64x128xf32>
    %15 = arith.truncf %14 : vector<64x128xf32> to vector<64x128xbf16>
    %c0_8 = arith.constant 0 : index
    %c0_9 = arith.constant 0 : index
    %16 = vector.load %arg4[%c0_8, %c0_9] : memref<128x16xbf16, #tpu.memory_space<vmem>>, vector<128x16xbf16>
    %cst_10 = arith.constant dense<0.000000e+00> : vector<64x16xf32>
    %17 = tpu.matmul %15, %16, %cst_10 {dimension_numbers = #tpu.dot_dimension_numbers<[1], [0], [0], [1], [0, 0, 1, 1], [], []>} : vector<64x128xbf16>, vector<128x16xbf16>, vector<64x16xf32> -> vector<64x16xf32>
    %c0_11 = arith.constant 0 : index
    %c0_12 = arith.constant 0 : index
    %18 = vector.load %arg5[%c0_11, %c0_12] : memref<1x16xf32, #tpu.memory_space<vmem>>, vector<1x16xf32>
    %19 = vector.broadcast %18 : vector<1x16xf32> to vector<64x16xf32>
    %20 = arith.addf %17, %19 : vector<64x16xf32>
    %21 = vector.shape_cast %20 : vector<64x16xf32> to vector<8x128xf32>
    %c0_13 = arith.constant 0 : index
    %c0_14 = arith.constant 0 : index
    %22 = vector.load %arg6[%c0_13, %c0_14] : memref<8x128xf32, #tpu.memory_space<vmem>>, vector<8x128xf32>
    tpu.vector_store %arg6[%c0_13, %c0_14], %21 {strides = array<i32>} : memref<8x128xf32, #tpu.memory_space<vmem>>, vector<8x128xf32>,
    return
  }
  func.func @transform_0(%arg0: i32) -> (i32, i32) {
    %c0_i32 = arith.constant 0 : i32
    %c0_i32_0 = arith.constant 0 : i32
    return %arg0, %c0_i32 : i32, i32
  }
  func.func @transform_1(%arg0: i32) -> (i32, i32) {
    %c0_i32 = arith.constant 0 : i32
    %c0_i32_0 = arith.constant 0 : i32
    %c0_i32_1 = arith.constant 0 : i32
    return %c0_i32, %c0_i32_0 : i32, i32
  }
  func.func @transform_2(%arg0: i32) -> (i32, i32) {
    %c0_i32 = arith.constant 0 : i32
    %c0_i32_0 = arith.constant 0 : i32
    %c0_i32_1 = arith.constant 0 : i32
    return %c0_i32, %c0_i32_0 : i32, i32
  }
  func.func @transform_3(%arg0: i32) -> (i32, i32) {
    %c0_i32 = arith.constant 0 : i32
    %c0_i32_0 = arith.constant 0 : i32
    %c0_i32_1 = arith.constant 0 : i32
    return %c0_i32, %c0_i32_0 : i32, i32
  }
  func.func @transform_4(%arg0: i32) -> (i32, i32) {
    %c0_i32 = arith.constant 0 : i32
    %c0_i32_0 = arith.constant 0 : i32
    %c0_i32_1 = arith.constant 0 : i32
    return %c0_i32, %c0_i32_0 : i32, i32
  }
  func.func @transform_5(%arg0: i32) -> (i32, i32) {
    %c0_i32 = arith.constant 0 : i32
    %c0_i32_0 = arith.constant 0 : i32
    return %arg0, %c0_i32 : i32, i32
  }
}

module attributes {stable_mosaic.version = 11 : i64} {
  func.func @_semseg_kernel(%arg0: i32, %arg1: memref<64x128xf32, #tpu.memory_space<vmem>>, %arg2: memref<128x128xbf16, #tpu.memory_space<vmem>>, %arg3: memref<1x128xf32, #tpu.memory_space<vmem>>, %arg4: memref<128x16xbf16, #tpu.memory_space<vmem>>, %arg5: memref<1x16xf32, #tpu.memory_space<vmem>>, %arg6: memref<64x16xf32, #tpu.memory_space<vmem>>) attributes {dimension_semantics = [#tpu.dimension_semantics<parallel>], iteration_bounds = array<i64: 1>, scalar_prefetch = 0 : i64, scratch_operands = 0 : i64, tpu.core_type = #tpu.core_type<tc>, window_params = [{transform_indices = @transform_0, window_bounds = array<i64: 64, 128>}, {pipeline_mode = #tpu.pipeline_mode<synchronous>, transform_indices = @transform_1, window_bounds = array<i64: 128, 128>}, {pipeline_mode = #tpu.pipeline_mode<synchronous>, transform_indices = @transform_2, window_bounds = array<i64: 1, 128>}, {pipeline_mode = #tpu.pipeline_mode<synchronous>, transform_indices = @transform_3, window_bounds = array<i64: 128, 16>}, {pipeline_mode = #tpu.pipeline_mode<synchronous>, transform_indices = @transform_4, window_bounds = array<i64: 1, 16>}, {transform_indices = @transform_5, window_bounds = array<i64: 64, 16>}]} {
    %c0 = arith.constant 0 : index
    %c0_0 = arith.constant 0 : index
    %0 = vector.load %arg2[%c0, %c0_0] : memref<128x128xbf16, #tpu.memory_space<vmem>>, vector<128x128xbf16>
    %c0_1 = arith.constant 0 : index
    %c0_2 = arith.constant 0 : index
    %1 = vector.load %arg3[%c0_1, %c0_2] : memref<1x128xf32, #tpu.memory_space<vmem>>, vector<1x128xf32>
    %c0_3 = arith.constant 0 : index
    %c0_4 = arith.constant 0 : index
    %2 = vector.load %arg1[%c0_3, %c0_4] : memref<64x128xf32, #tpu.memory_space<vmem>>, vector<64x128xf32>
    %3 = arith.truncf %2 : vector<64x128xf32> to vector<64x128xbf16>
    %cst = arith.constant dense<0.000000e+00> : vector<64x128xf32>
    %4 = tpu.matmul %3, %0, %cst {dimension_numbers = #tpu.dot_dimension_numbers<[1], [0], [0], [1], [0, 0, 1, 1], [], []>} : vector<64x128xbf16>, vector<128x128xbf16>, vector<64x128xf32> -> vector<64x128xf32>
    %5 = vector.broadcast %1 : vector<1x128xf32> to vector<64x128xf32>
    %6 = arith.addf %4, %5 : vector<64x128xf32>
    %cst_5 = arith.constant 0.000000e+00 : f32
    %7 = vector.broadcast %cst_5 : f32 to vector<64x128xf32>
    %8 = arith.maximumf %6, %7 : vector<64x128xf32>
    %9 = arith.truncf %8 : vector<64x128xf32> to vector<64x128xbf16>
    %cst_6 = arith.constant dense<0.000000e+00> : vector<64x128xf32>
    %10 = tpu.matmul %9, %0, %cst_6 {dimension_numbers = #tpu.dot_dimension_numbers<[1], [0], [0], [1], [0, 0, 1, 1], [], []>} : vector<64x128xbf16>, vector<128x128xbf16>, vector<64x128xf32> -> vector<64x128xf32>
    %11 = vector.broadcast %1 : vector<1x128xf32> to vector<64x128xf32>
    %12 = arith.addf %10, %11 : vector<64x128xf32>
    %cst_7 = arith.constant 0.000000e+00 : f32
    %13 = vector.broadcast %cst_7 : f32 to vector<64x128xf32>
    %14 = arith.maximumf %12, %13 : vector<64x128xf32>
    %15 = arith.truncf %14 : vector<64x128xf32> to vector<64x128xbf16>
    %c0_8 = arith.constant 0 : index
    %c0_9 = arith.constant 0 : index
    %16 = vector.load %arg4[%c0_8, %c0_9] : memref<128x16xbf16, #tpu.memory_space<vmem>>, vector<128x16xbf16>
    %cst_10 = arith.constant dense<0.000000e+00> : vector<64x16xf32>
    %17 = tpu.matmul %15, %16, %cst_10 {dimension_numbers = #tpu.dot_dimension_numbers<[1], [0], [0], [1], [0, 0, 1, 1], [], []>} : vector<64x128xbf16>, vector<128x16xbf16>, vector<64x16xf32> -> vector<64x16xf32>
    %c0_11 = arith.constant 0 : index
    %c0_12 = arith.constant 0 : index
    %18 = vector.load %arg5[%c0_11, %c0_12] : memref<1x16xf32, #tpu.memory_space<vmem>>, vector<1x16xf32>
    %19 = vector.broadcast %18 : vector<1x16xf32> to vector<64x16xf32>
    %20 = arith.addf %17, %19 : vector<64x16xf32>
    %c0_13 = arith.constant 0 : index
    %c0_14 = arith.constant 0 : index
    %21 = vector.load %arg6[%c0_13, %c0_14] : memref<64x16xf32, #tpu.memory_space<vmem>>, vector<64x16xf32>
    tpu.vector_store %arg6[%c0_13, %c0_14], %20 {strides = array<i32>} : memref<64x16xf32, #tpu.memory_space<vmem>>, vector<64x16xf32>,
    return
  }
  func.func @transform_0(%arg0: i32) -> (i32, i32) {
    %c0_i32 = arith.constant 0 : i32
    %c0_i32_0 = arith.constant 0 : i32
    return %arg0, %c0_i32 : i32, i32
  }
  func.func @transform_1(%arg0: i32) -> (i32, i32) {
    %c0_i32 = arith.constant 0 : i32
    %c0_i32_0 = arith.constant 0 : i32
    %c0_i32_1 = arith.constant 0 : i32
    return %c0_i32, %c0_i32_0 : i32, i32
  }
  func.func @transform_2(%arg0: i32) -> (i32, i32) {
    %c0_i32 = arith.constant 0 : i32
    %c0_i32_0 = arith.constant 0 : i32
    %c0_i32_1 = arith.constant 0 : i32
    return %c0_i32, %c0_i32_0 : i32, i32
  }
  func.func @transform_3(%arg0: i32) -> (i32, i32) {
    %c0_i32 = arith.constant 0 : i32
    %c0_i32_0 = arith.constant 0 : i32
    %c0_i32_1 = arith.constant 0 : i32
    return %c0_i32, %c0_i32_0 : i32, i32
  }
  func.func @transform_4(%arg0: i32) -> (i32, i32) {
    %c0_i32 = arith.constant 0 : i32
    %c0_i32_0 = arith.constant 0 : i32
    %c0_i32_1 = arith.constant 0 : i32
    return %c0_i32, %c0_i32_0 : i32, i32
  }
  func.func @transform_5(%arg0: i32) -> (i32, i32) {
    %c0_i32 = arith.constant 0 : i32
    %c0_i32_0 = arith.constant 0 : i32
    return %arg0, %c0_i32 : i32, i32
  }
}

</mosaic_0001>

<llo_original>
// kernel: tpu_custom_call.1
$region0: #{tpu_custom_call.1}
  #allocation0 [shape = 'u32[]', space=smem, size = 0x4, offset = 0x4, fixed_abs, tag = 'smem constant byte address 0x4 - core index']
  #allocation1 [shape = 'u32[72,128]{1,0:T(1,128)}', space=vmem, size = 0x9000, scoped, tag = 'internal scratch']
  %s0 = inlined_call_operand.vmem [shape: f32[64,128], index: 0, kind: input, shape index: {}]
  %s1 = inlined_call_operand.hbm [shape: bf16[128,128], index: 1, kind: input, shape index: {}]
  %s2 = inlined_call_operand.vmem [shape: f32[1,128], index: 2, kind: input, shape index: {}]
  %s3 = inlined_call_operand.vmem [shape: bf16[128,16], index: 3, kind: input, shape index: {}]
  %s4 = inlined_call_operand.vmem [shape: f32[1,16], index: 4, kind: input, shape index: {}]
  %s5 = inlined_call_operand.vmem [shape: f32[64,16], index: 5, kind: output, shape index: {}]
  %s6 = sld [smem:[#allocation0]]
  $region34: #{tpu_custom_call.1} parent=0
    _
  %s8 = ssub.s32 1, %s6
  %s9 = scalar_select 0, %s8, %s6
  $region1: #{tpu_custom_call.1} parent=0
    #allocation2 [shape = 'u8[32768]{0}', space=vmem, size = 0x8000, scoped, tag = 'input window, operand 1, single buffered']
    #allocation3 [shape = 's32[1]{0}', space=sflag, size = 0x4, scoped, tag = 'scoped memory for tpu_custom_call.1']
    %10 = vsyncpa [#allocation3], 0
    // Predicated region
    $region2: #{tpu_custom_call.1} parent=1 // pred_check
      _
    $region3: #{tpu_custom_call.1} parent=1 // pred_check_branch
      %12 = sbr.rel (0) target = $region5
    $region4: #{tpu_custom_call.1} parent=1 // pred_region
      _
    $region5: #{tpu_custom_call.1} parent=1 // pred_fallthru
      _
    // Predicated region
    $region6: #{tpu_custom_call.1} parent=1 // pred_check
      _
    $region7: #{tpu_custom_call.1} parent=1 // pred_check_branch
      %14 = sbr.rel (0) target = $region9
    $region8: #{tpu_custom_call.1} parent=1 // pred_region
      %16 = vsyncadd [#allocation3], 0
      %s17 = sshll.u32 %s1, 4
      %s18 = int_to_ptr.hbm [resolvable:$true] %s17
      %s19 = sshll.u32 [#allocation2], 4
      %s20 = int_to_ptr.vmem [resolvable:$true] %s19
      %25 = dma.hbm_to_vmem [thread:$0]  %s18, 1024, %s20, [#allocation3], 64, 64, 4
    $region9: #{tpu_custom_call.1} parent=1 // pred_fallthru
      _
    // Predicated region
    $region10: #{tpu_custom_call.1} parent=1 // pred_check
      _
    $region11: #{tpu_custom_call.1} parent=1 // pred_check_branch
      %27 = sbr.rel (0) target = $region13
    $region12: #{tpu_custom_call.1} parent=1 // pred_region
      _
    $region13: #{tpu_custom_call.1} parent=1 // pred_fallthru
      _
    // Predicated region
    $region14: #{tpu_custom_call.1} parent=1 // pred_check
      _
    $region15: #{tpu_custom_call.1} parent=1 // pred_check_branch
      %29 = sbr.rel (0) target = $region17
    $region16: #{tpu_custom_call.1} parent=1 // pred_region
      _
    $region17: #{tpu_custom_call.1} parent=1 // pred_fallthru
      _
    // Predicated region
    $region18: #{tpu_custom_call.1} parent=1 // pred_check
      _
    $region19: #{tpu_custom_call.1} parent=1 // pred_check_branch
      %31 = sbr.rel (0) target = $region21
    $region20: #{tpu_custom_call.1} parent=1 // pred_region
      _
    $region21: #{tpu_custom_call.1} parent=1 // pred_fallthru
      _
    // Predicated region
    $region22: #{tpu_custom_call.1} parent=1 // pred_check
      _
    $region23: #{tpu_custom_call.1} parent=1 // pred_check_branch
      %33 = sbr.rel (0) target = $region25
    $region24: #{tpu_custom_call.1} parent=1 // pred_region
      %35 = dma.done [#allocation3], 1024
    $region25: #{tpu_custom_call.1} parent=1 // pred_fallthru
      _
    %v36 = vld [vmem:[#allocation2] sm:$0xf]
    %v37 = vld [vmem:[#allocation2 + $0x4] sm:$0xf]
    %v38 = vld [vmem:[#allocation2 + $0x8] sm:$0xf]
    %v39 = vld [vmem:[#allocation2 + $0xc] sm:$0xf]
    %v40 = vld [vmem:[#allocation2 + $0x10] sm:$0xf]
    %v41 = vld [vmem:[#allocation2 + $0x14] sm:$0xf]
    %v42 = vld [vmem:[#allocation2 + $0x18] sm:$0xf]
    %v43 = vld [vmem:[#allocation2 + $0x1c] sm:$0xf]
    %v44 = vld [vmem:[#allocation2 + $0x20] sm:$0xf]
    %v45 = vld [vmem:[#allocation2 + $0x24] sm:$0xf]
    %v46 = vld [vmem:[#allocation2 + $0x28] sm:$0xf]
    %v47 = vld [vmem:[#allocation2 + $0x2c] sm:$0xf]
    %v48 = vld [vmem:[#allocation2 + $0x30] sm:$0xf]
    %v49 = vld [vmem:[#allocation2 + $0x34] sm:$0xf]
    %v50 = vld [vmem:[#allocation2 + $0x38] sm:$0xf]
    %v51 = vld [vmem:[#allocation2 + $0x3c] sm:$0xf]
    %v52 = vld [vmem:[%s2] sm:$0x1]
    %v53 = vld [vmem:[%s0] sm:$0xff]
    %v54 = vld [vmem:[%s0 + $0x8] sm:$0xff]
    %v55 = vld [vmem:[%s0 + $0x10] sm:$0xff]
    %v56 = vld [vmem:[%s0 + $0x18] sm:$0xff]
    %v57 = vld [vmem:[%s0 + $0x20] sm:$0xff]
    %v58 = vld [vmem:[%s0 + $0x28] sm:$0xff]
    %v59 = vld [vmem:[%s0 + $0x30] sm:$0xff]
    %v60 = vld [vmem:[%s0 + $0x38] sm:$0xff]
    %v61 = vpack.c.bf16 %v54, %v53
    %v62 = vpack.c.bf16 %v56, %v55
    %v63 = vpack.c.bf16 %v58, %v57
    %v64 = vpack.c.bf16 %v60, %v59
    %v66 = vperm.slane %v52, 0
    %v84 = vunpack.c.l.b16 %v36
    %v85 = vunpack.c.l.b16 %v37
    %v86 = vunpack.c.l.b16 %v38
    %v87 = vunpack.c.l.b16 %v39
    %v88 = vunpack.c.l.b16 %v40
    %v89 = vunpack.c.l.b16 %v41
    %v90 = vunpack.c.l.b16 %v42
    %v91 = vunpack.c.l.b16 %v43
    %v92 = vunpack.c.l.b16 %v44
    %v93 = vunpack.c.l.b16 %v45
    %v94 = vunpack.c.l.b16 %v46
    %v95 = vunpack.c.l.b16 %v47
    %v96 = vunpack.c.l.b16 %v48
    %v97 = vunpack.c.l.b16 %v49
    %v98 = vunpack.c.l.b16 %v50
    %v99 = vunpack.c.l.b16 %v51
    %v100 = vpack.c.b16 %v85, %v84
    %v101 = vpack.c.b16 %v87, %v86
    %v102 = vpack.c.b16 %v89, %v88
    %v103 = vpack.c.b16 %v91, %v90
    %v104 = vpack.c.b16 %v93, %v92
    %v105 = vpack.c.b16 %v95, %v94
    %v106 = vpack.c.b16 %v97, %v96
    %v107 = vpack.c.b16 %v99, %v98
    %116 = vmatpush.bf16.msra.mxu0 %v107
    %117 = vmatpush.bf16.msra.mxu0 %v106
    %118 = vmatpush.bf16.msra.mxu0 %v105
    %119 = vmatpush.bf16.msra.mxu0 %v104
    %120 = vmatpush.bf16.msra.mxu0 %v103
    %121 = vmatpush.bf16.msra.mxu0 %v102
    %122 = vmatpush.bf16.msra.mxu0 %v101
    %123 = vmatpush.bf16.msra.mxu0 %v100
    %124 = vmatmul.bf16.gmra.mxu0 %v61
    %v125 = vpop.f32.mrf.mxu0
    %v126 = vadd.f32 %v66, %v125
    %v127 = vpop.f32.mrf.mxu0
    %v128 = vadd.f32 %v66, %v127
    %129 = vmatmul.bf16.gmra.mxu0 %v62
    %v130 = vpop.f32.mrf.mxu0
    %v131 = vadd.f32 %v66, %v130
    %v132 = vpop.f32.mrf.mxu0
    %v133 = vadd.f32 %v66, %v132
    %134 = vmatmul.bf16.gmra.mxu0 %v63
    %v135 = vpop.f32.mrf.mxu0
    %v136 = vadd.f32 %v66, %v135
    %v137 = vpop.f32.mrf.mxu0
    %v138 = vadd.f32 %v66, %v137
    %139 = vmatmul.bf16.gmra.mxu0 %v64
    %v140 = vpop.f32.mrf.mxu0
    %v141 = vadd.f32 %v66, %v140
    %v142 = vpop.f32.mrf.mxu0
    %v143 = vadd.f32 %v66, %v142
    %144 = vdwg.mxu0
    %v145 = vmax.f32 %v126, 0.0
    %v146 = vmax.f32 %v128, 0.0
    %v147 = vmax.f32 %v131, 0.0
    %v148 = vmax.f32 %v133, 0.0
    %v149 = vmax.f32 %v136, 0.0
    %v150 = vmax.f32 %v138, 0.0
    %v151 = vmax.f32 %v141, 0.0
    %v152 = vmax.f32 %v143, 0.0
    %v153 = vpack.c.bf16 %v146, %v145
    %v154 = vpack.c.bf16 %v148, %v147
    %v155 = vpack.c.bf16 %v150, %v149
    %v156 = vpack.c.bf16 %v152, %v151
    %157 = vmatpush.bf16.msra.mxu0 %v107
    %158 = vmatpush.bf16.msra.mxu0 %v106
    %159 = vmatpush.bf16.msra.mxu0 %v105
    %160 = vmatpush.bf16.msra.mxu0 %v104
    %161 = vmatpush.bf16.msra.mxu0 %v103
    %162 = vmatpush.bf16.msra.mxu0 %v102
    %163 = vmatpush.bf16.msra.mxu0 %v101
    %164 = vmatpush.bf16.msra.mxu0 %v100
    %165 = vmatmul.bf16.gmra.mxu0 %v153
    %v166 = vpop.f32.mrf.mxu0
    %v167 = vadd.f32 %v66, %v166
    %v168 = vpop.f32.mrf.mxu0
    %v169 = vadd.f32 %v66, %v168
    %170 = vmatmul.bf16.gmra.mxu0 %v154
    %v171 = vpop.f32.mrf.mxu0
    %v172 = vadd.f32 %v66, %v171
    %v173 = vpop.f32.mrf.mxu0
    %v174 = vadd.f32 %v66, %v173
    %175 = vmatmul.bf16.gmra.mxu0 %v155
    %v176 = vpop.f32.mrf.mxu0
    %v177 = vadd.f32 %v66, %v176
    %v178 = vpop.f32.mrf.mxu0
    %v179 = vadd.f32 %v66, %v178
    %180 = vmatmul.bf16.gmra.mxu0 %v156
    %v181 = vpop.f32.mrf.mxu0
    %v182 = vadd.f32 %v66, %v181
    %v183 = vpop.f32.mrf.mxu0
    %v184 = vadd.f32 %v66, %v183
    %185 = vdwg.mxu0
    %v186 = vmax.f32 %v167, 0.0
    %v187 = vmax.f32 %v169, 0.0
    %v188 = vmax.f32 %v172, 0.0
    %v189 = vmax.f32 %v174, 0.0
    %v190 = vmax.f32 %v177, 0.0
    %v191 = vmax.f32 %v179, 0.0
    %v192 = vmax.f32 %v182, 0.0
    %v193 = vmax.f32 %v184, 0.0
    %v194 = vpack.c.bf16 %v187, %v186
    %v195 = vpack.c.bf16 %v189, %v188
    %v196 = vpack.c.bf16 %v191, %v190
    %v197 = vpack.c.bf16 %v193, %v192
    %v198 = vld [vmem:[%s3] sm:$0xf]
    %v199 = vld [vmem:[%s3 + $0x4] sm:$0xf]
    %v200 = vld [vmem:[%s3 + $0x8] sm:$0xf]
    %v201 = vld [vmem:[%s3 + $0xc] sm:$0xf]
    %v202 = vld [vmem:[%s3 + $0x10] sm:$0xf]
    %v203 = vld [vmem:[%s3 + $0x14] sm:$0xf]
    %v204 = vld [vmem:[%s3 + $0x18] sm:$0xf]
    %v205 = vld [vmem:[%s3 + $0x1c] sm:$0xf]
    %v206 = vld [vmem:[%s3 + $0x20] sm:$0xf]
    %v207 = vld [vmem:[%s3 + $0x24] sm:$0xf]
    %v208 = vld [vmem:[%s3 + $0x28] sm:$0xf]
    %v209 = vld [vmem:[%s3 + $0x2c] sm:$0xf]
    %v210 = vld [vmem:[%s3 + $0x30] sm:$0xf]
    %v211 = vld [vmem:[%s3 + $0x34] sm:$0xf]
    %v212 = vld [vmem:[%s3 + $0x38] sm:$0xf]
    %v213 = vld [vmem:[%s3 + $0x3c] sm:$0xf]
    %v214 = vld [vmem:[%s4] sm:$0x1]
    %v216 = vperm.slane %v214, 0
    %v234 = vunpack.c.l.b16 %v198
    %v235 = vunpack.c.l.b16 %v199
    %v236 = vunpack.c.l.b16 %v200
    %v237 = vunpack.c.l.b16 %v201
    %v238 = vunpack.c.l.b16 %v202
    %v239 = vunpack.c.l.b16 %v203
    %v240 = vunpack.c.l.b16 %v204
    %v241 = vunpack.c.l.b16 %v205
    %v242 = vunpack.c.l.b16 %v206
    %v243 = vunpack.c.l.b16 %v207
    %v244 = vunpack.c.l.b16 %v208
    %v245 = vunpack.c.l.b16 %v209
    %v246 = vunpack.c.l.b16 %v210
    %v247 = vunpack.c.l.b16 %v211
    %v248 = vunpack.c.l.b16 %v212
    %v249 = vunpack.c.l.b16 %v213
    %v250 = vpack.c.b16 %v235, %v234
    %v251 = vpack.c.b16 %v237, %v236
    %v252 = vpack.c.b16 %v239, %v238
    %v253 = vpack.c.b16 %v241, %v240
    %v254 = vpack.c.b16 %v243, %v242
    %v255 = vpack.c.b16 %v245, %v244
    %v256 = vpack.c.b16 %v247, %v246
    %v257 = vpack.c.b16 %v249, %v248
    %266 = vmatpush.bf16.msra.mxu0 %v257
    %267 = vmatpush.bf16.msra.mxu0 %v256
    %268 = vmatpush.bf16.msra.mxu0 %v255
    %269 = vmatpush.bf16.msra.mxu0 %v254
    %270 = vmatpush.bf16.msra.mxu0 %v253
    %271 = vmatpush.bf16.msra.mxu0 %v252
    %272 = vmatpush.bf16.msra.mxu0 %v251
    %273 = vmatpush.bf16.msra.mxu0 %v250
    %274 = vmatmul.bf16.gmra.mxu0 %v194
    %v275 = vpop.f32.mrf.mxu0
    %v276 = vadd.f32 %v216, %v275
    %v277 = vpop.f32.mrf.mxu0
    %v278 = vadd.f32 %v216, %v277
    %279 = vmatmul.bf16.gmra.mxu0 %v195
    %v280 = vpop.f32.mrf.mxu0
    %v281 = vadd.f32 %v216, %v280
    %v282 = vpop.f32.mrf.mxu0
    %v283 = vadd.f32 %v216, %v282
    %284 = vmatmul.bf16.gmra.mxu0 %v196
    %v285 = vpop.f32.mrf.mxu0
    %v286 = vadd.f32 %v216, %v285
    %v287 = vpop.f32.mrf.mxu0
    %v288 = vadd.f32 %v216, %v287
    %289 = vmatmul.bf16.gmra.mxu0 %v197
    %v290 = vpop.f32.mrf.mxu0
    %v291 = vadd.f32 %v216, %v290
    %v292 = vpop.f32.mrf.mxu0
    %v293 = vadd.f32 %v216, %v292
    %294 = vdwg.mxu0
    %vm295 = vcmask 130048
    %296 = vst.msk [vmem:[%s5] sm:$0xff] %vm295, %v276
    %297 = vst.msk [vmem:[%s5 + $0x8] sm:$0xff] %vm295, %v278
    %298 = vst.msk [vmem:[%s5 + $0x10] sm:$0xff] %vm295, %v281
    %299 = vst.msk [vmem:[%s5 + $0x18] sm:$0xff] %vm295, %v283
    %300 = vst.msk [vmem:[%s5 + $0x20] sm:$0xff] %vm295, %v286
    %301 = vst.msk [vmem:[%s5 + $0x28] sm:$0xff] %vm295, %v288
    %302 = vst.msk [vmem:[%s5 + $0x30] sm:$0xff] %vm295, %v291
    %303 = vst.msk [vmem:[%s5 + $0x38] sm:$0xff] %vm295, %v293
    // Predicated region
    $region26: #{tpu_custom_call.1} parent=1 // pred_check
      _
    $region27: #{tpu_custom_call.1} parent=1 // pred_check_branch
      %305 = sbr.rel (0) target = $region29
    $region28: #{tpu_custom_call.1} parent=1 // pred_region
      _
    $region29: #{tpu_custom_call.1} parent=1 // pred_fallthru
      _
    // Predicated region
    $region30: #{tpu_custom_call.1} parent=1 // pred_check
      _
    $region31: #{tpu_custom_call.1} parent=1 // pred_check_branch
      %307 = sbr.rel (0) target = $region33
    $region32: #{tpu_custom_call.1} parent=1 // pred_region
      _
    $region33: #{tpu_custom_call.1} parent=1 // pred_fallthru
      _
    %308 = vsyncpa [#allocation3], 1

</llo_original>
